<compile_context>
chip_gen: v7x
topology: tpu7x:2x2x1
jax: 0.10.0
libtpu: 0.0.40
codegen_flags: <defaults>
</compile_context>

<pallas_src>
import functools
import math

import jax
import jax.numpy as jnp
from jax import lax
from jax.experimental import pallas as pl
from jax.experimental.pallas import tpu as pltpu


# ----------------------------------------------------------------------------
# small math helpers shared by the kernels and the pure-JAX reference
# ----------------------------------------------------------------------------
_GELU_C = math.sqrt(2.0 / math.pi)


def _gelu_tanh(x):
    return 0.5 * x * (1.0 + jnp.tanh(_GELU_C * (x + 0.044715 * (x * x * x))))


def _layernorm(x, gamma, beta, eps):
    mu = jnp.mean(x, axis=-1, keepdims=True)
    var = jnp.mean(jnp.square(x - mu), axis=-1, keepdims=True)
    return (x - mu) * lax.rsqrt(var + eps) * gamma + beta


# ----------------------------------------------------------------------------
# Pallas kernels
# ----------------------------------------------------------------------------
def embed_kernel(p_ref, w_ref, b_ref, pos_ref, out_ref):
    # p_ref: (1, S, Pd) flattened patches; single MXU matmul + bias + pos-emb.
    e = jnp.dot(p_ref[0], w_ref[...], preferred_element_type=jnp.float32)
    out_ref[0] = (e + b_ref[0] + pos_ref[0]).astype(out_ref.dtype)


def layernorm_kernel(x_ref, g_ref, b_ref, out_ref, *, eps):
    out_ref[0] = _layernorm(x_ref[0], g_ref[0], b_ref[0], eps).astype(out_ref.dtype)


def block_kernel(*refs, num_heads, head_dim, ln_eps, vis):
    if vis:
        (x_ref, ln1g_ref, ln1b_ref, wqkv_ref, bqkv_ref, wo_ref, bo_ref,
         ln2g_ref, ln2b_ref, w1_ref, b1_ref, w2_ref, b2_ref,
         out_ref, probs_ref) = refs
    else:
        (x_ref, ln1g_ref, ln1b_ref, wqkv_ref, bqkv_ref, wo_ref, bo_ref,
         ln2g_ref, ln2b_ref, w1_ref, b1_ref, w2_ref, b2_ref,
         out_ref) = refs
        probs_ref = None

    S, H = x_ref.shape[1], x_ref.shape[2]
    x = x_ref[0]                                                    # [S, H]

    # ---------------- attention branch ----------------
    xn = _layernorm(x, ln1g_ref[0], ln1b_ref[0], ln_eps)            # [S, H]

    # Fused, head-batched QKV projection: a single dot_general (batch = head),
    # result [nh, S, 3*hd] already has heads leading.
    xb = jnp.broadcast_to(xn[None], (num_heads, S, H))
    qkv = lax.dot_general(xb, wqkv_ref[...],
                          dimension_numbers=(((2,), (1,)), ((0,), (0,))),
                          preferred_element_type=jnp.float32)
    qkv = qkv + bqkv_ref[...]                                       # [nh, S, 3*hd]

    q = qkv[:, :, :head_dim]
    k = qkv[:, :, head_dim:2 * head_dim]
    v = qkv[:, :, 2 * head_dim:]

    # scores [nh, S, S]: contract on head_dim, no explicit transpose.
    scores = lax.dot_general(q, k,
                             dimension_numbers=(((2,), (2,)), ((0,), (0,))),
                             preferred_element_type=jnp.float32)
    scores = scores * (1.0 / math.sqrt(head_dim))

    # numerically stable row softmax; reciprocal on the EUP.
    m = jnp.max(scores, axis=-1, keepdims=True)
    e = jnp.exp(scores - m)
    denom = jnp.sum(e, axis=-1, keepdims=True)
    probs = e * pl.reciprocal(denom, approx=True)                   # [nh, S, S]

    if probs_ref is not None:
        probs_ref[0] = probs                                        # vis output

    # context [nh, S, hd]
    ctx = lax.dot_general(probs, v,
                          dimension_numbers=(((2,), (1,)), ((0,), (0,))),
                          preferred_element_type=jnp.float32)

    # head-batched output projection + reduce over heads (replaces concat).
    o_heads = lax.dot_general(ctx, wo_ref[...],
                              dimension_numbers=(((2,), (1,)), ((0,), (0,))),
                              preferred_element_type=jnp.float32)   # [nh, S, H]
    attn_out = jnp.sum(o_heads, axis=0) + bo_ref[0]

    x = x + attn_out                                                # residual 1

    # ---------------- MLP branch ----------------
    xn2 = _layernorm(x, ln2g_ref[0], ln2b_ref[0], ln_eps)
    h = jnp.dot(xn2, w1_ref[...], preferred_element_type=jnp.float32) + b1_ref[0]
    h = _gelu_tanh(h)
    h = jnp.dot(h, w2_ref[...], preferred_element_type=jnp.float32) + b2_ref[0]

    out_ref[0] = (x + h).astype(out_ref.dtype)                      # residual 2


# ----------------------------------------------------------------------------
# wrappers (pallas_call plumbing)
# ----------------------------------------------------------------------------
def embeddings_forward(x_img, conv_w, conv_b, pos_emb, *, patch):
    B, C, Himg, Wimg = x_img.shape
    P = patch
    Hg, Wg = Himg // P, Wimg // P
    S = Hg * Wg
    hidden = conv_w.shape[0]
    Pd = C * P * P

    # non-overlapping conv == patch extraction + matmul (layout plumbing only)
    patches = (x_img.reshape(B, C, Hg, P, Wg, P)
               .transpose(0, 2, 4, 1, 3, 5)
               .reshape(B, S, Pd))
    w_flat = conv_w.reshape(hidden, Pd).T                 # [Pd, hidden]
    b_row = conv_b.reshape(1, hidden)

    return pl.pallas_call(
        embed_kernel,
        out_shape=jax.ShapeDtypeStruct((B, S, hidden), x_img.dtype),
        grid_spec=pltpu.PrefetchScalarGridSpec(
            num_scalar_prefetch=0,
            grid=(B,),
            in_specs=[
                pl.BlockSpec((1, S, Pd), lambda b: (b, 0, 0)),
                pl.BlockSpec((Pd, hidden), lambda b: (0, 0)),
                pl.BlockSpec((1, hidden), lambda b: (0, 0)),
                pl.BlockSpec((1, S, hidden), lambda b: (0, 0, 0)),
            ],
            out_specs=pl.BlockSpec((1, S, hidden), lambda b: (b, 0, 0)),
        ),
        compiler_params=pltpu.CompilerParams(dimension_semantics=("parallel",)),
    )(patches, w_flat, b_row, pos_emb)


def block_forward(x, packed, *, num_heads, vis=True, ln_eps=1e-6):
    B, S, H = x.shape
    hd = H // num_heads
    (ln1_g, ln1_b, w_qkv, b_qkv, w_o, b_o,
     ln2_g, ln2_b, w1, b1, w2, b2) = packed
    M = w1.shape[1]

    kernel = functools.partial(block_kernel, num_heads=num_heads, head_dim=hd,
                               ln_eps=ln_eps, vis=vis)

    def rep(shape):  # replicated weight block (VMEM-resident across the grid)
        return pl.BlockSpec(shape, lambda b: (0,) * len(shape))

    in_specs = [
        pl.BlockSpec((1, S, H), lambda b: (b, 0, 0)),         # hidden states
        rep((1, H)), rep((1, H)),                             # attention_norm
        rep((num_heads, H, 3 * hd)), rep((num_heads, 1, 3 * hd)),  # fused QKV
        rep((num_heads, hd, H)), rep((1, H)),                 # out projection
        rep((1, H)), rep((1, H)),                             # ffn_norm
        rep((H, M)), rep((1, M)),                             # fc1
        rep((M, H)), rep((1, H)),                             # fc2
    ]
    out_shape = [jax.ShapeDtypeStruct((B, S, H), x.dtype)]
    out_specs = [pl.BlockSpec((1, S, H), lambda b: (b, 0, 0))]
    if vis:
        out_shape.append(jax.ShapeDtypeStruct((B, num_heads, S, S), jnp.float32))
        out_specs.append(pl.BlockSpec((1, num_heads, S, S),
                                      lambda b: (b, 0, 0, 0)))

    results = pl.pallas_call(
        kernel,
        out_shape=tuple(out_shape),
        grid_spec=pltpu.PrefetchScalarGridSpec(
            num_scalar_prefetch=0,
            grid=(B,),
            in_specs=in_specs,
            out_specs=tuple(out_specs),
        ),
        compiler_params=pltpu.CompilerParams(dimension_semantics=("parallel",)),
    )(x, *packed)

    if vis:
        hidden, probs = results
        return hidden, probs
    (hidden,) = results
    return hidden, None


def encoder_norm_forward(x, gamma_row, beta_row, *, eps=1e-6):
    B, S, H = x.shape
    kernel = functools.partial(layernorm_kernel, eps=eps)
    return pl.pallas_call(
        kernel,
        out_shape=jax.ShapeDtypeStruct((B, S, H), x.dtype),
        grid_spec=pltpu.PrefetchScalarGridSpec(
            num_scalar_prefetch=0,
            grid=(B,),
            in_specs=[pl.BlockSpec((1, S, H), lambda b: (b, 0, 0)),
                      pl.BlockSpec((1, H), lambda b: (0, 0)),
                      pl.BlockSpec((1, H), lambda b: (0, 0))],
            out_specs=pl.BlockSpec((1, S, H), lambda b: (b, 0, 0)),
        ),
        compiler_params=pltpu.CompilerParams(dimension_semantics=("parallel",)),
    )(x, gamma_row, beta_row)


def transformer_forward(x_img, conv_w, conv_b, pos_emb, packed_blocks,
                        enc_g, enc_b, *, num_heads, patch, vis=True, ln_eps=1e-6):
    hs = embeddings_forward(x_img, conv_w, conv_b, pos_emb, patch=patch)
    attn_weights = []
    for packed in packed_blocks:
        hs, w = block_forward(hs, packed, num_heads=num_heads, vis=vis,
                              ln_eps=ln_eps)
        if vis:
            attn_weights.append(w)
    encoded = encoder_norm_forward(hs, enc_g.reshape(1, -1), enc_b.reshape(1, -1),
                                   eps=ln_eps)
    return encoded, attn_weights


# ----------------------------------------------------------------------------
# host-side packing of "torch-layout" per-block params into kernel layouts
# ----------------------------------------------------------------------------
def pack_block_params(p, num_heads):
    H = p['wq'].shape[0]
    hd = H // num_heads

    def head_cols(w):                         # [H, H] -> [nh, H, hd]
        return w.reshape(H, num_heads, hd).transpose(1, 0, 2)

    def head_bias(b):                         # [H] -> [nh, 1, hd]
        return b.reshape(num_heads, 1, hd)

    w_qkv = jnp.concatenate([head_cols(p['wq']), head_cols(p['wk']),
                             head_cols(p['wv'])], axis=-1)      # [nh, H, 3*hd]
    b_qkv = jnp.concatenate([head_bias(p['bq']), head_bias(p['bk']),
                             head_bias(p['bv'])], axis=-1)      # [nh, 1, 3*hd]
    w_o = p['wo'].reshape(num_heads, hd, H)                     # [nh, hd, H]

    return (p['ln1_g'].reshape(1, H), p['ln1_b'].reshape(1, H),
            w_qkv, b_qkv, w_o, p['bo'].reshape(1, H),
            p['ln2_g'].reshape(1, H), p['ln2_b'].reshape(1, H),
            p['w_fc1'], p['b_fc1'].reshape(1, -1),
            p['w_fc2'], p['b_fc2'].reshape(1, -1))


# ----------------------------------------------------------------------------
# pure-JAX reference mirroring the PyTorch forward (eval mode)
# ----------------------------------------------------------------------------
def _ref_attention(x, p, num_heads):
    B, S, H = x.shape
    hd = H // num_heads
    q = x @ p['wq'] + p['bq']
    k = x @ p['wk'] + p['bk']
    v = x @ p['wv'] + p['bv']

    def split(t):
        return t.reshape(B, S, num_heads, hd).transpose(0, 2, 1, 3)

    qh, kh, vh = split(q), split(k), split(v)
    scores = jnp.einsum('bnqd,bnkd->bnqk', qh, kh) / math.sqrt(hd)
    probs = jax.nn.softmax(scores, axis=-1)
    ctx = jnp.einsum('bnqk,bnkd->bnqd', probs, vh)
    ctx = ctx.transpose(0, 2, 1, 3).reshape(B, S, H)
    return ctx @ p['wo'] + p['bo'], probs


def reference_transformer(x_img, conv_w, conv_b, pos_emb, raw_blocks,
                          enc_g, enc_b, *, num_heads, patch, ln_eps=1e-6):
    P = patch
    y = lax.conv_general_dilated(x_img, conv_w, (P, P), 'VALID',
                                 dimension_numbers=('NCHW', 'OIHW', 'NCHW'))
    y = y + conv_b[None, :, None, None]
    B, hidden = y.shape[0], y.shape[1]
    hs = y.reshape(B, hidden, -1).transpose(0, 2, 1) + pos_emb

    weights_list = []
    for p in raw_blocks:
        h = hs
        xn = _layernorm(hs, p['ln1_g'], p['ln1_b'], ln_eps)
        a, w = _ref_attention(xn, p, num_heads)
        hs = a + h
        h = hs
        xn = _layernorm(hs, p['ln2_g'], p['ln2_b'], ln_eps)
        m = _gelu_tanh(xn @ p['w_fc1'] + p['b_fc1']) @ p['w_fc2'] + p['b_fc2']
        hs = hs + m
        weights_list.append(w)

    encoded = _layernorm(hs, enc_g, enc_b, ln_eps)
    return encoded, weights_list


# ----------------------------------------------------------------------------
if __name__ == "__main__":
    # config: img 16x16, in_channels=4, patch 4 -> S=16; hidden=32, heads=4,
    # mlp_dim=64, num_layers=2, batch=2  (vis=True as in the module)
    B, C, IMG, PATCH = 2, 4, 16, 4
    HIDDEN, NUM_HEADS, MLP_DIM, NUM_LAYERS = 32, 4, 64, 2
    S = (IMG // PATCH) ** 2

    key = jax.random.PRNGKey(0)
    keys = iter(jax.random.split(key, 64))

    def nrm(shape, scale):
        return jax.random.normal(next(keys), shape, jnp.float32) * scale

    x = jax.random.normal(next(keys), (B, C, IMG, IMG), dtype=jnp.float32)

    conv_w = nrm((HIDDEN, C, PATCH, PATCH), 1.0 / math.sqrt(C * PATCH * PATCH))
    conv_b = nrm((HIDDEN,), 0.01)
    pos_emb = nrm((1, S, HIDDEN), 0.02)
    enc_g = 1.0 + nrm((HIDDEN,), 0.01)
    enc_b = nrm((HIDDEN,), 0.01)

    raw_blocks = []
    for _ in range(NUM_LAYERS):
        raw_blocks.append({
            'ln1_g': 1.0 + nrm((HIDDEN,), 0.01), 'ln1_b': nrm((HIDDEN,), 0.01),
            'wq': nrm((HIDDEN, HIDDEN), 1.0 / math.sqrt(HIDDEN)),
            'bq': nrm((HIDDEN,), 0.01),
            'wk': nrm((HIDDEN, HIDDEN), 1.0 / math.sqrt(HIDDEN)),
            'bk': nrm((HIDDEN,), 0.01),
            'wv': nrm((HIDDEN, HIDDEN), 1.0 / math.sqrt(HIDDEN)),
            'bv': nrm((HIDDEN,), 0.01),
            'wo': nrm((HIDDEN, HIDDEN), 1.0 / math.sqrt(HIDDEN)),
            'bo': nrm((HIDDEN,), 0.01),
            'ln2_g': 1.0 + nrm((HIDDEN,), 0.01), 'ln2_b': nrm((HIDDEN,), 0.01),
            'w_fc1': nrm((HIDDEN, MLP_DIM), 1.0 / math.sqrt(HIDDEN)),
            'b_fc1': nrm((MLP_DIM,), 1e-3),
            'w_fc2': nrm((MLP_DIM, HIDDEN), 1.0 / math.sqrt(MLP_DIM)),
            'b_fc2': nrm((HIDDEN,), 1e-3),
        })

    packed_blocks = [pack_block_params(p, NUM_HEADS) for p in raw_blocks]

    encoded, attn_w = transformer_forward(
        x, conv_w, conv_b, pos_emb, packed_blocks, enc_g, enc_b,
        num_heads=NUM_HEADS, patch=PATCH, vis=True)
    encoded = jax.block_until_ready(encoded)
    attn_w = [jax.block_until_ready(w) for w in attn_w]

    ref_encoded, ref_w = reference_transformer(
        x, conv_w, conv_b, pos_emb, raw_blocks, enc_g, enc_b,
        num_heads=NUM_HEADS, patch=PATCH)

    assert encoded.shape == (B, S, HIDDEN)
    assert len(attn_w) == NUM_LAYERS
    assert attn_w[0].shape == (B, NUM_HEADS, S, S)
    assert jnp.allclose(encoded, ref_encoded, atol=2e-2, rtol=2e-2)
    for a, r in zip(attn_w, ref_w):
        assert jnp.allclose(a, r, atol=2e-2, rtol=2e-2)

    print("KERNEL_OK")
</pallas_src>

<mosaic_0001>
module attributes {stable_mosaic.version = 11 : i64} {
  func.func @embed_kernel(%arg0: i32, %arg1: memref<1x16x64xf32, #tpu.memory_space<vmem>>, %arg2: memref<64x32xf32, #tpu.memory_space<vmem>>, %arg3: memref<1x32xf32, #tpu.memory_space<vmem>>, %arg4: memref<1x16x32xf32, #tpu.memory_space<vmem>>, %arg5: memref<1x16x32xf32, #tpu.memory_space<vmem>>) attributes {dimension_semantics = [#tpu.dimension_semantics<parallel>], iteration_bounds = array<i64: 2>, scalar_prefetch = 0 : i64, scratch_operands = 0 : i64, tpu.core_type = #tpu.core_type<tc>, window_params = [{transform_indices = @transform_0, window_bounds = array<i64: 1, 16, 64>}, {pipeline_mode = #tpu.pipeline_mode<synchronous>, transform_indices = @transform_1, window_bounds = array<i64: 64, 32>}, {pipeline_mode = #tpu.pipeline_mode<synchronous>, transform_indices = @transform_2, window_bounds = array<i64: 1, 32>}, {pipeline_mode = #tpu.pipeline_mode<synchronous>, transform_indices = @transform_3, window_bounds = array<i64: 1, 16, 32>}, {transform_indices = @transform_4, window_bounds = array<i64: 1, 16, 32>}]} {
    %c0 = arith.constant 0 : index
    %c0_0 = arith.constant 0 : index
    %c0_1 = arith.constant 0 : index
    %0 = vector.load %arg1[%c0, %c0_0, %c0_1] : memref<1x16x64xf32, #tpu.memory_space<vmem>>, vector<1x16x64xf32>
    %1 = vector.shape_cast %0 : vector<1x16x64xf32> to vector<16x64xf32>
    %c0_2 = arith.constant 0 : index
    %c0_3 = arith.constant 0 : index
    %2 = vector.load %arg2[%c0_2, %c0_3] : memref<64x32xf32, #tpu.memory_space<vmem>>, vector<64x32xf32>
    %cst = arith.constant dense<0.000000e+00> : vector<16x32xf32>
    %3 = tpu.matmul %1, %2, %cst {dimension_numbers = #tpu.dot_dimension_numbers<[1], [0], [0], [1], [0, 0, 1, 1], [], []>} : vector<16x64xf32>, vector<64x32xf32>, vector<16x32xf32> -> vector<16x32xf32>
    %c0_4 = arith.constant 0 : index
    %c0_5 = arith.constant 0 : index
    %4 = vector.load %arg3[%c0_4, %c0_5] : memref<1x32xf32, #tpu.memory_space<vmem>>, vector<1x32xf32>
    %5 = vector.shape_cast %4 : vector<1x32xf32> to vector<32xf32>
    %6 = vector.shape_cast %5 : vector<32xf32> to vector<1x32xf32>
    %7 = vector.broadcast %6 : vector<1x32xf32> to vector<16x32xf32>
    %8 = arith.addf %3, %7 : vector<16x32xf32>
    %c0_6 = arith.constant 0 : index
    %c0_7 = arith.constant 0 : index
    %c0_8 = arith.constant 0 : index
    %9 = vector.load %arg4[%c0_6, %c0_7, %c0_8] : memref<1x16x32xf32, #tpu.memory_space<vmem>>, vector<1x16x32xf32>
    %10 = vector.shape_cast %9 : vector<1x16x32xf32> to vector<16x32xf32>
    %11 = arith.addf %8, %10 : vector<16x32xf32>
    %c0_9 = arith.constant 0 : index
    %c0_10 = arith.constant 0 : index
    %c0_11 = arith.constant 0 : index
    %12 = vector.load %arg5[%c0_9, %c0_10, %c0_11] : memref<1x16x32xf32, #tpu.memory_space<vmem>>, vector<1x16x32xf32>
    %13 = vector.shape_cast %12 : vector<1x16x32xf32> to vector<16x32xf32>
    %14 = vector.shape_cast %11 : vector<16x32xf32> to vector<1x16x32xf32>
    tpu.vector_store %arg5[%c0_9, %c0_10, %c0_11], %14 {strides = array<i32>} : memref<1x16x32xf32, #tpu.memory_space<vmem>>, vector<1x16x32xf32>,
    return
  }
  func.func @transform_0(%arg0: i32) -> (i32, i32, i32) {
    %c0_i32 = arith.constant 0 : i32
    %c0_i32_0 = arith.constant 0 : i32
    %c0_i32_1 = arith.constant 0 : i32
    return %arg0, %c0_i32, %c0_i32_0 : i32, i32, i32
  }
  func.func @transform_1(%arg0: i32) -> (i32, i32) {
    %c0_i32 = arith.constant 0 : i32
    %c0_i32_0 = arith.constant 0 : i32
    %c0_i32_1 = arith.constant 0 : i32
    return %c0_i32, %c0_i32_0 : i32, i32
  }
  func.func @transform_2(%arg0: i32) -> (i32, i32) {
    %c0_i32 = arith.constant 0 : i32
    %c0_i32_0 = arith.constant 0 : i32
    %c0_i32_1 = arith.constant 0 : i32
    return %c0_i32, %c0_i32_0 : i32, i32
  }
  func.func @transform_3(%arg0: i32) -> (i32, i32, i32) {
    %c0_i32 = arith.constant 0 : i32
    %c0_i32_0 = arith.constant 0 : i32
    %c0_i32_1 = arith.constant 0 : i32
    %c0_i32_2 = arith.constant 0 : i32
    return %c0_i32, %c0_i32_0, %c0_i32_1 : i32, i32, i32
  }
  func.func @transform_4(%arg0: i32) -> (i32, i32, i32) {
    %c0_i32 = arith.constant 0 : i32
    %c0_i32_0 = arith.constant 0 : i32
    %c0_i32_1 = arith.constant 0 : i32
    return %arg0, %c0_i32, %c0_i32_0 : i32, i32, i32
  }
}

</mosaic_0001>

<llo_original>
// kernel: tpu_custom_call.1
$region0: #{tpu_custom_call.1}
  #allocation0 [shape = 'u32[]', space=smem, size = 0x4, offset = 0x4, fixed_abs, tag = 'smem constant byte address 0x4 - core index']
  #allocation1 [shape = 'u32[144,128]{1,0:T(1,128)}', space=vmem, size = 0x12000, scoped, tag = 'internal scratch']
  %s0 = inlined_call_operand.vmem [shape: f32[2,16,64], index: 0, kind: input, shape index: {}]
  %s1 = inlined_call_operand.vmem [shape: f32[64,32], index: 1, kind: input, shape index: {}]
  %s2 = inlined_call_operand.vmem [shape: f32[1,32], index: 2, kind: input, shape index: {}]
  %s3 = inlined_call_operand.vmem [shape: f32[1,16,32], index: 3, kind: input, shape index: {}]
  %s4 = inlined_call_operand.hbm [shape: f32[2,16,32], index: 4, kind: output, shape index: {}]
  %s5 = sld [smem:[#allocation0]]
  $region49: #{tpu_custom_call.1} parent=0
    _
  %s7 = ssub.s32 1, %s5
  %s8 = scalar_select 0, %s7, %s5
  $region1: #{tpu_custom_call.1} parent=0
    #allocation2 [shape = 'u8[16384]{0}', space=vmem, size = 0x4000, scoped, tag = 'output window, operand 0']
    #allocation3 [shape = 's32[2]{0}', space=sflag, size = 0x8, scoped, tag = 'scoped memory for tpu_custom_call.1']
    %9 = vsyncpa [#allocation3], 0
    %s10 = scalar_lea.sflag [#allocation3], 1
    %11 = vsyncpa %s10, 0
    loop: start=0, step=1, limit=4
    $region2: #{tpu_custom_call.1} parent=1 // loop_pre_header
      _
    $region3: #{tpu_custom_call.1} parent=1 // loop_header
      %s13 = sphi 0, %s17
      %p14 = scmp.ge.s32.totalorder %s13, 4
      %s23 = sphi 0, %s25
      %s26 = sphi 0, %s23
      %s27 = sphi 0, %s26
      %s43 = sphi 0, %s27
      %s47 = sphi 0, %s47
      %s49 = sphi 0, %s47
      %s50 = sphi 0, %s49
      %s64 = sphi 0, %s50
      %s68 = sphi 0, %s68
      %s70 = sphi 0, %s68
      %s71 = sphi 0, %s70
      %s85 = sphi 0, %s71
      %s89 = sphi 0, %s89
      %s91 = sphi 0, %s89
      %s92 = sphi 0, %s91
      %s106 = sphi 0, %s92
      %s112 = sphi 0, %s114
      %s115 = sphi 0, %s112
      %s116 = sphi 0, %s115
      %s132 = sphi 0, %s116
    $region4: #{tpu_custom_call.1} parent=1 // loop_header_branch
      %16 = sbr.rel (%p14) target = $region8
    $region5: #{tpu_custom_call.1} parent=1 // loop_body
      %s18 = ssub.s32 %s13, 1
      %s19 = ssub.s32 %s13, 2
      %s20 = sadd.s32 %s13, 1
      %s21 = ssub.s32 %s13, %s20
      %p22 = scmp.eq.s32.totalorder %s21, 0
      %s24 = sadd.s32 %s23, 1
      %s25 = scalar_select %p22, %s23, %s24
      %p28 = pneg %p22
      %p29 = scmp.eq.s32.totalorder %s13, 1
      %p30 = por %p28, %p29
      %p31 = scmp.ne.s32.totalorder %s23, %s26
      %p32 = scmp.eq.s32.totalorder %s13, 0
      %p33 = por %p31, %p32
      %p34 = scmp.ne.s32.totalorder %s23, %s26
      %p35 = scmp.eq.s32.totalorder %s18, 1
      %p36 = por %p34, %p35
      %p37 = scmp.ne.s32.totalorder %s26, %s27
      %p38 = scmp.eq.s32.totalorder %s18, 0
      %p39 = por %p37, %p38
      %p40 = scmp.ne.s32.totalorder %s26, %s27
      %p41 = scmp.eq.s32.totalorder %s19, 1
      %p42 = por %p40, %p41
      %p44 = scmp.ne.s32.totalorder %s27, %s43
      %p45 = scmp.eq.s32.totalorder %s19, 0
      %p46 = por %p44, %p45
      %s48 = sadd.s32 %s47, 1
      %p51 = scmp.eq.s32.totalorder %s13, 1
      %p52 = scmp.ne.s32.totalorder %s47, %s49
      %p53 = scmp.eq.s32.totalorder %s13, 0
      %p54 = por %p52, %p53
      %p55 = scmp.ne.s32.totalorder %s47, %s49
      %p56 = scmp.eq.s32.totalorder %s18, 1
      %p57 = por %p55, %p56
      %p58 = scmp.ne.s32.totalorder %s49, %s50
      %p59 = scmp.eq.s32.totalorder %s18, 0
      %p60 = por %p58, %p59
      %p61 = scmp.ne.s32.totalorder %s49, %s50
      %p62 = scmp.eq.s32.totalorder %s19, 1
      %p63 = por %p61, %p62
      %p65 = scmp.ne.s32.totalorder %s50, %s64
      %p66 = scmp.eq.s32.totalorder %s19, 0
      %p67 = por %p65, %p66
      %s69 = sadd.s32 %s68, 1
      %p72 = scmp.eq.s32.totalorder %s13, 1
      %p73 = scmp.ne.s32.totalorder %s68, %s70
      %p74 = scmp.eq.s32.totalorder %s13, 0
      %p75 = por %p73, %p74
      %p76 = scmp.ne.s32.totalorder %s68, %s70
      %p77 = scmp.eq.s32.totalorder %s18, 1
      %p78 = por %p76, %p77
      %p79 = scmp.ne.s32.totalorder %s70, %s71
      %p80 = scmp.eq.s32.totalorder %s18, 0
      %p81 = por %p79, %p80
      %p82 = scmp.ne.s32.totalorder %s70, %s71
      %p83 = scmp.eq.s32.totalorder %s19, 1
      %p84 = por %p82, %p83
      %p86 = scmp.ne.s32.totalorder %s71, %s85
      %p87 = scmp.eq.s32.totalorder %s19, 0
      %p88 = por %p86, %p87
      %s90 = sadd.s32 %s89, 1
      %p93 = scmp.eq.s32.totalorder %s13, 1
      %p94 = scmp.ne.s32.totalorder %s89, %s91
      %p95 = scmp.eq.s32.totalorder %s13, 0
      %p96 = por %p94, %p95
      %p97 = scmp.ne.s32.totalorder %s89, %s91
      %p98 = scmp.eq.s32.totalorder %s18, 1
      %p99 = por %p97, %p98
      %p100 = scmp.ne.s32.totalorder %s91, %s92
      %p101 = scmp.eq.s32.totalorder %s18, 0
      %p102 = por %p100, %p101
      %p103 = scmp.ne.s32.totalorder %s91, %s92
      %p104 = scmp.eq.s32.totalorder %s19, 1
      %p105 = por %p103, %p104
      %p107 = scmp.ne.s32.totalorder %s92, %s106
      %p108 = scmp.eq.s32.totalorder %s19, 0
      %p109 = por %p107, %p108
      %s110 = ssub.s32 %s13, %s20
      %p111 = scmp.eq.s32.totalorder %s110, 0
      %s113 = sadd.s32 %s112, 1
      %s114 = scalar_select %p111, %s112, %s113
      %p117 = pneg %p111
      %p118 = scmp.eq.s32.totalorder %s13, 1
      %p119 = por %p117, %p118
      %p120 = scmp.ne.s32.totalorder %s112, %s115
      %p121 = scmp.eq.s32.totalorder %s13, 0
      %p122 = por %p120, %p121
      %p123 = scmp.ne.s32.totalorder %s112, %s115
      %p124 = scmp.eq.s32.totalorder %s18, 1
      %p125 = por %p123, %p124
      %p126 = scmp.ne.s32.totalorder %s115, %s116
      %p127 = scmp.eq.s32.totalorder %s18, 0
      %p128 = por %p126, %p127
      %p129 = scmp.ne.s32.totalorder %s115, %s116
      %p130 = scmp.eq.s32.totalorder %s19, 1
      %p131 = por %p129, %p130
      %p133 = scmp.ne.s32.totalorder %s116, %s132
      %p134 = scmp.eq.s32.totalorder %s19, 0
      %p135 = por %p133, %p134
      %p136 = scmp.le.s32.totalorder 1, %s13
      %p137 = scmp.lt.s32.totalorder %s13, 3
      %p138 = pnand %p136, %p137
      %p139 = pneg %p138
      // Predicated region
      $region9: #{tpu_custom_call.1} parent=5 // pred_check
        _
      $region10: #{tpu_custom_call.1} parent=5 // pred_check_branch
        %141 = sbr.rel (%p138) target = $region12
      $region11: #{tpu_custom_call.1} parent=5 // pred_region
        %s142 = ssub.s32 %s13, 1
        // Predicated region
        $region13: #{tpu_custom_call.1} parent=11 // pred_check
          %p143 = pneg %p60
        $region14: #{tpu_custom_call.1} parent=11 // pred_check_branch
          %145 = sbr.rel (%p143) target = $region16
        $region15: #{tpu_custom_call.1} parent=11 // pred_region
          _
        $region16: #{tpu_custom_call.1} parent=11 // pred_fallthru
          _
        // Predicated region
        $region17: #{tpu_custom_call.1} parent=11 // pred_check
          %p146 = pneg %p81
        $region18: #{tpu_custom_call.1} parent=11 // pred_check_branch
          %148 = sbr.rel (%p146) target = $region20
        $region19: #{tpu_custom_call.1} parent=11 // pred_region
          _
        $region20: #{tpu_custom_call.1} parent=11 // pred_fallthru
          _
        // Predicated region
        $region21: #{tpu_custom_call.1} parent=11 // pred_check
          %p149 = pneg %p102
        $region22: #{tpu_custom_call.1} parent=11 // pred_check_branch
          %151 = sbr.rel (%p149) target = $region24
        $region23: #{tpu_custom_call.1} parent=11 // pred_region
          _
        $region24: #{tpu_custom_call.1} parent=11 // pred_fallthru
          _
      $region12: #{tpu_custom_call.1} parent=5 // pred_fallthru
        _
      %p152 = scmp.lt.s32.totalorder %s13, 2
      // Predicated region
      $region25: #{tpu_custom_call.1} parent=5 // pred_check
        %p153 = pneg %p152
      $region26: #{tpu_custom_call.1} parent=5 // pred_check_branch
        %155 = sbr.rel (%p153) target = $region28
      $region27: #{tpu_custom_call.1} parent=5 // pred_region
        // Predicated region
        $region29: #{tpu_custom_call.1} parent=27 // pred_check
          %p156 = pneg %p33
        $region30: #{tpu_custom_call.1} parent=27 // pred_check_branch
          %158 = sbr.rel (%p156) target = $region32
        $region31: #{tpu_custom_call.1} parent=27 // pred_region
          %p159 = scmp.lt.s32.totalorder %s13, 1
          %s160 = scalar_select %p159, %s13, 1
          %s161 = smul.addr %s160, 2
          %s162 = smul.addr %s161, 8
          %s163 = scalar_lea.vmem %s0, %s162
        $region32: #{tpu_custom_call.1} parent=27 // pred_fallthru
          _
      $region28: #{tpu_custom_call.1} parent=5 // pred_fallthru
        _
      %p164 = scmp.le.s32.totalorder 1, %s13
      %p165 = scmp.lt.s32.totalorder %s13, 3
      %p166 = pnand %p164, %p165
      %p167 = pneg %p166
      // Predicated region
      $region33: #{tpu_custom_call.1} parent=5 // pred_check
        _
      $region34: #{tpu_custom_call.1} parent=5 // pred_check_branch
        %169 = sbr.rel (%p166) target = $region36
      $region35: #{tpu_custom_call.1} parent=5 // pred_region
        %s170 = ssub.s32 %s13, 1
        %p171 = scmp.lt.s32.totalorder %s18, 1
        %s172 = scalar_select %p171, %s18, 1
        %s173 = smul.addr %s172, 2
        %s174 = smul.addr %s173, 8
        %s175 = scalar_lea.vmem %s0, %s174
        %p176 = pneg %p39
        %p177 = pneg %p36
        %p178 = pneg %p60
        %p179 = pneg %p57
        %p180 = pneg %p81
        %p181 = pneg %p78
        %p182 = pneg %p102
        %p183 = pneg %p99
        %p184 = pneg %p128
        %p185 = pneg %p125
        %s186 = sand.u32 %s115, 1
        %s187 = scalar_lea.sflag [#allocation3], %s186
        %s188 = sand.u32 %s115, 1
        %s189 = smul.addr %s188, 16
        %s190 = scalar_lea.vmem [#allocation2], %s189
        %p191 = scmp.lt.s32.totalorder %s18, 1
        %s192 = scalar_select %p191, %s18, 1
        %s193 = smul.addr %s192, 2
        %s194 = smul.addr %s193, 8
        %s195 = scalar_lea.vmem %s0, %s194
        %v196 = vld [vmem:[%s195] sm:$0xff]
        %v197 = vld [vmem:[%s195 + $0x8] sm:$0xff]
        %v198 = vld [vmem:[%s1] sm:$0xff]
        %v199 = vld [vmem:[%s1 + $0x8] sm:$0xff]
        %v200 = vld [vmem:[%s1 + $0x10] sm:$0xff]
        %v201 = vld [vmem:[%s1 + $0x18] sm:$0xff]
        %v202 = vld [vmem:[%s1 + $0x20] sm:$0xff]
        %v203 = vld [vmem:[%s1 + $0x28] sm:$0xff]
        %v204 = vld [vmem:[%s1 + $0x30] sm:$0xff]
        %v205 = vld [vmem:[%s1 + $0x38] sm:$0xff]
        %v206 = vld [vmem:[%s2] sm:$0x1]
        %v208 = vlaneseq
        %v209 = vshrl.u32 %v208, 7
        %v210 = vsub.s32 0, %v209
        %v211 = vrot.slane %v206, %v210
        %vm213 = vcmask 523264
        %v215 = vsel %vm213, %v196, 0
        %v218 = vsel %vm213, %v197, 0
        %220 = vmatprep.subr.mxu0 0.0
        %221 = vmatpush1.msra.mxu0 %v198
        %222 = vmatprep.subr.mxu0 0.0
        %223 = vmatpush1.msra.mxu0 %v199
        %224 = vmatprep.subr.mxu0 0.0
        %225 = vmatpush1.msra.mxu0 %v200
        %226 = vmatprep.subr.mxu0 0.0
        %227 = vmatpush1.msra.mxu0 %v201
        %228 = vmatprep.subr.mxu0 0.0
        %229 = vmatpush1.msra.mxu0 %v202
        %230 = vmatprep.subr.mxu0 0.0
        %231 = vmatpush1.msra.mxu0 %v203
        %232 = vmatprep.subr.mxu0 0.0
        %233 = vmatpush1.msra.mxu0 %v204
        %234 = vmatprep.subr.mxu0 0.0
        %235 = vmatpush1.msra.mxu0 %v205
        %236 = vmatprep.subr.mxu0 0.0
        %237 = vmatpush1.msra.mxu0 0.0
        %238 = vmatprep.subr.mxu0 0.0
        %239 = vmatpush1.msra.mxu0 0.0
        %240 = vmatprep.subr.mxu0 0.0
        %241 = vmatpush1.msra.mxu0 0.0
        %242 = vmatprep.subr.mxu0 0.0
        %243 = vmatpush1.msra.mxu0 0.0
        %244 = vmatprep.subr.mxu0 0.0
        %245 = vmatpush1.msra.mxu0 0.0
        %246 = vmatprep.subr.mxu0 0.0
        %247 = vmatpush1.msra.mxu0 0.0
        %248 = vmatprep.subr.mxu0 0.0
        %249 = vmatpush1.msra.mxu0 0.0
        %250 = vmatprep.subr.mxu0 0.0
        %251 = vmatpush1.msra.mxu0 0.0
        %252 = vmatprep.subr.mxu0 0.0
        %253 = vmatpush1.msra.mxu0 0.0
        %254 = vmatprep.subr.mxu0 0.0
        %255 = vmatpush1.msra.mxu0 0.0
        %256 = vmatprep.subr.mxu0 0.0
        %257 = vmatpush1.msra.mxu0 0.0
        %258 = vmatprep.subr.mxu0 0.0
        %259 = vmatpush1.msra.mxu0 0.0
        %260 = vmatprep.subr.mxu0 0.0
        %261 = vmatpush1.msra.mxu0 0.0
        %262 = vmatprep.subr.mxu0 0.0
        %263 = vmatpush1.msra.mxu0 0.0
        %264 = vmatprep.subr.mxu0 0.0
        %265 = vmatpush1.msra.mxu0 0.0
        %266 = vmatprep.subr.mxu0 0.0
        %267 = vmatpush1.msra.mxu0 0.0
        %268 = vmatprep.subr.mxu0 0.0
        %269 = vmatpush1.msra.mxu0 0.0
        %270 = vmatprep.subr.mxu0 0.0
        %271 = vmatpush1.msra.mxu0 0.0
        %272 = vmatprep.subr.mxu0 0.0
        %273 = vmatpush1.msra.mxu0 0.0
        %274 = vmatprep.subr.mxu0 0.0
        %275 = vmatpush1.msra.mxu0 0.0
        %276 = vmatprep.subr.mxu0 0.0
        %277 = vmatpush1.msra.mxu0 0.0
        %278 = vmatprep.subr.mxu0 0.0
        %279 = vmatpush1.msra.mxu0 0.0
        %280 = vmatprep.subr.mxu0 0.0
        %281 = vmatpush1.msra.mxu0 0.0
        %282 = vmatprep.subr.mxu0 0.0
        %283 = vmatpush1.msra.mxu0 0.0
        %284 = vmatprep.mubr.f32.mxu0 0.0
        %285 = vmatmul.mubr.f32.gmra.mrb[0].mxu0 %v215
        %v286 = vpop.f32.mrb[0].mxu0
        %v287 = vadd.f32 %v211, %v286
        %v288 = vpop.f32.mrb[0].mxu0
        %289 = vmatprep.mubr.f32.mxu0 0.0
        %290 = vmatmul.mubr.f32.gmra.mrb[0].mxu0 %v218
        %v291 = vpop.f32.mrb[0].mxu0
        %v292 = vadd.f32 %v211, %v291
        %v293 = vpop.f32.mrb[0].mxu0
        %294 = vdwg.mxu0
        %v295 = vld [vmem:[%s3] sm:$0xff]
        %v296 = vld [vmem:[%s3 + $0x8] sm:$0xff]
        %v297 = vadd.f32 %v287, %v295
        %v298 = vadd.f32 %v292, %v296
        %vm299 = vcmask 261120
        %300 = vst.msk [vmem:[%s190] sm:$0xff] %vm299, %v297
        %301 = vst.msk [vmem:[%s190 + $0x8] sm:$0xff] %vm299, %v298
        %s302 = sand.u32 %s115, 1
        %s303 = scalar_lea.sflag [#allocation3], %s302
        %s304 = sand.u32 %s115, 1
        %s305 = smul.addr %s304, 16
        %s306 = scalar_lea.vmem [#allocation2], %s305
        // Predicated region
        $region37: #{tpu_custom_call.1} parent=35 // pred_check
          %p307 = pneg %p125
        $region38: #{tpu_custom_call.1} parent=35 // pred_check_branch
          %309 = sbr.rel (%p307) target = $region40
        $region39: #{tpu_custom_call.1} parent=35 // pred_region
          %s311 = ssub.s32 256, 256
          %312 = vsyncadd %s303, %s311
          %s313 = smul.addr %s18, 2
          %s314 = smul.addr %s313, 128
          %s315 = scalar_lea.hbm %s4, %s314
          %s316 = sshll.u32 %s306, 4
          %s317 = int_to_ptr.vmem [resolvable:$true] %s316
          %322 = dma.vmem_to_hbm [thread:$0]  %s317, 256, %s315, %s303, 128, 128, 8
        $region40: #{tpu_custom_call.1} parent=35 // pred_fallthru
          _
      $region36: #{tpu_custom_call.1} parent=5 // pred_fallthru
        _
      %p323 = scmp.le.s32.totalorder 2, %s13
      // Predicated region
      $region41: #{tpu_custom_call.1} parent=5 // pred_check
        %p324 = pneg %p323
      $region42: #{tpu_custom_call.1} parent=5 // pred_check_branch
        %326 = sbr.rel (%p324) target = $region44
      $region43: #{tpu_custom_call.1} parent=5 // pred_region
        %s327 = ssub.s32 %s13, 2
        // Predicated region
        $region45: #{tpu_custom_call.1} parent=43 // pred_check
          %p328 = pneg %p131
        $region46: #{tpu_custom_call.1} parent=43 // pred_check_branch
          %330 = sbr.rel (%p328) target = $region48
        $region47: #{tpu_custom_call.1} parent=43 // pred_region
          %s331 = sand.u32 %s116, 1
          %s332 = scalar_lea.sflag [#allocation3], %s331
          %s333 = sand.u32 %s116, 1
          %s334 = smul.addr %s333, 16
          %s335 = scalar_lea.vmem [#allocation2], %s334
          %336 = dma.done %s332, 256
        $region48: #{tpu_custom_call.1} parent=43 // pred_fallthru
          _
      $region44: #{tpu_custom_call.1} parent=5 // pred_fallthru
        _
    $region6: #{tpu_custom_call.1} parent=1 // loop_footer
      %s17 = sadd.s32 1, %s13
    $region7: #{tpu_custom_call.1} parent=1 // loop_footer_branch
      %12 = sbr.rel target = $region3
    $region8: #{tpu_custom_call.1} parent=1 // loop_exit
      _
    %337 = vsyncpa [#allocation3], 1
    %s338 = scalar_lea.sflag [#allocation3], 1
    %339 = vsyncpa %s338, 1

</llo_original>
